<compile_context>
chip_gen: v6e
topology: v6e:2x2x1
jax: 0.10.0
libtpu: 0.0.40
codegen_flags: <defaults>
</compile_context>

<pallas_src>
import numpy as np
import jax
import jax.numpy as jnp
from jax import lax
from jax.experimental import pallas as pl
from jax.experimental.pallas import tpu as pltpu

TASK_BG = {0: [0, 3, 4, 5, 6, 7, 8, 9, 10, 11], 1: [0, 1, 2, 5, 6, 7, 8, 9, 10, 11],
           2: [0, 1, 2, 3, 4, 7, 8, 9, 10, 11], 3: [0, 1, 2, 3, 4, 5, 6, 9, 10, 11],
           4: [0, 1, 2, 3, 4, 5, 6, 7, 8, 10, 11], 5: [0, 1, 2, 3, 4, 5, 6, 7, 8, 9, 11],
           6: [0, 1, 2, 3, 4, 5, 6, 7, 8, 9, 10]}
TASK_NBG = {0: [1, 2], 1: [3, 4], 2: [5, 6], 3: [7, 8], 4: [9], 5: [10], 6: [11]}
NUM_CLASSES = 12

# Deterministic module parameter from TAL.__init__ : weights = ones(1, 12)
WEIGHTS = np.ones((1, NUM_CLASSES), dtype=np.float32)
_UNIT_WEIGHTS = bool(np.all(WEIGHTS == 1.0))


def _build_tables():
    # meta[t]   = [fg_channel_1, fg_channel_2 (padded to fg1), label_delta, num_fg]
    # bgmask[t] = 0/1 mask over the 12 channels marking this task's bg channels
    # wcls[t]   = cross-entropy weights of the merged classes [bg, fg1, fg2(or 0)]
    meta = np.zeros((7, 4), np.int32)
    bgmask = np.zeros((7, NUM_CLASSES), np.float32)
    wcls = np.zeros((7, 3), np.float32)
    for t in range(7):
        nbg = TASK_NBG[t]
        c1 = nbg[0]
        c2 = nbg[1] if len(nbg) == 2 else nbg[0]
        delta = -2 * t if t <= 4 else -(t + 4)
        meta[t] = (c1, c2, delta, len(nbg))
        bgmask[t, TASK_BG[t]] = 1.0
        wcls[t, 0] = WEIGHTS[0, 0]
        wcls[t, 1] = WEIGHTS[0, c1]
        if len(nbg) == 2:
            wcls[t, 2] = WEIGHTS[0, c2]
    return meta, bgmask, wcls


META_TABLE, BGMASK_TABLE, WCLS_TABLE = _build_tables()


def _cdiv(a, b):
    return (a + b - 1) // b


def _tree_sum(terms):
    while len(terms) > 1:
        nxt = [terms[i] + terms[i + 1] for i in range(0, len(terms) - 1, 2)]
        if len(terms) % 2:
            nxt.append(terms[-1])
        terms = nxt
    return terms[0]


def _make_kernel(*, nv128, nt_in, tile_rows, unit_weights):
    """nv128: valid (sublane) rows of the flattened volume; nt_in: tiles per
    outer split; tile_rows: S (sublane rows per tile); unit_weights: WEIGHTS==1."""

    def kernel(*refs):
        if unit_weights:
            meta_ref, bgm_ref, x_ref, tgt_ref, out_ref = refs
            wcls_ref = None
        else:
            meta_ref, bgm_ref, wcls_ref, x_ref, tgt_ref, out_ref = refs

        b = pl.program_id(0)
        o = pl.program_id(1)
        v = pl.program_id(2)

        @pl.when(v == 0)
        def _init():
            out_ref[...] = jnp.zeros_like(out_ref)

        # Rows of this tile that correspond to real voxels (<=0 for the clamped
        # replay tiles produced by the robust n_outer=2 split).
        row_limit = nv128 - (o * nt_in + v) * tile_rows

        @pl.when(row_limit > 0)
        def _compute():
            c1 = meta_ref[b, 0]          # first foreground channel
            c2 = meta_ref[b, 1]          # second foreground channel (padded to c1)
            delta = meta_ref[b, 2]       # integer label shift for this task
            nfg = meta_ref[b, 3]         # number of foreground classes (1 or 2)
            two_fg = nfg == 2

            # Per-channel tiles (upcast per tile so bf16 inputs stay bf16 in HBM).
            xc = [x_ref[c].astype(jnp.float32) for c in range(NUM_CLASSES)]

            # Merged-background logit: direct masked tree-sum of bg channels
            # (mask values are per-sample SMEM scalars) -> no cancellation error.
            bg = _tree_sum([bgm_ref[b, c] * xc[c] for c in range(NUM_CLASSES)])

            fg1 = x_ref[c1].astype(jnp.float32)   # dynamic channel gathers
            fg2 = x_ref[c2].astype(jnp.float32)
            neg_big = jnp.float32(-1e30)
            fg2m = jnp.where(two_fg, fg2, neg_big)  # NaN-safe mask of missing class

            # Masked 3-way log-sum-exp over {bg, fg1, [fg2 if 2 fg classes]}.
            m = jnp.maximum(jnp.maximum(bg, fg1), fg2m)
            e = jnp.exp(bg - m) + jnp.exp(fg1 - m) + jnp.exp(fg2m - m)
            lse = m + jnp.log(e)

            # targets[i] = where(targets[i] > 0, delta, 0) + targets[i]
            tgt = tgt_ref[...].astype(jnp.int32)
            t = jnp.where(tgt > 0, tgt + delta, tgt)

            is1 = t == 1
            is2 = t == 2
            picked = jnp.where(is1, fg1, jnp.where(is2, fg2, bg))

            if wcls_ref is None:
                # WEIGHTS == ones: weight 1 for any in-range merged label.
                w_t = jnp.logical_and(t >= 0, t <= nfg).astype(jnp.float32)
            else:
                w_t = (wcls_ref[b, 0] * (t == 0).astype(jnp.float32)
                       + wcls_ref[b, 1] * is1.astype(jnp.float32)
                       + wcls_ref[b, 2] * is2.astype(jnp.float32))

            ce = lse - picked

            # Mask the ragged tail rows of the last spatial tile (OOB rows read
            # stale VMEM -> could be anything, including NaN; where() kills it).
            rows = lax.broadcasted_iota(jnp.int32, (tile_rows, 128), 0)
            valid = rows < row_limit
            out_ref[0] += jnp.where(valid, w_t * ce, jnp.float32(0.0))
            out_ref[1] += jnp.where(valid, w_t, jnp.float32(0.0))

    return kernel


def tal_loss_pallas(inputs, targets, task_id, *, block_rows=512):
    """inputs: (B, 12, D, H, W) f32/bf16 logits; targets: (B, D, H, W) integer-
    valued labels; task_id: (B,) int32.  Returns scalar loss = sum over batch of
    per-sample weighted-mean cross entropy over the task-reduced class set."""
    B, C, D, H, W = inputs.shape
    assert C == NUM_CLASSES
    V = D * H * W

    # Keep bf16 logits as bf16 (halves the dominant HBM traffic); else f32.
    x_dtype = jnp.bfloat16 if inputs.dtype == jnp.bfloat16 else jnp.float32
    x = inputs.reshape(B, C, V).astype(x_dtype)
    # Labels and deltas fit in int8; sentinel -1 -> zero weight.
    tgt = targets.reshape(B, V).astype(jnp.int8)

    # Only pad when V is not lane-aligned (<128 voxels); tile raggedness over the
    # sublane axis is handled in-kernel so no full padding copy is ever needed.
    if V % 128 != 0:
        pad = 128 - V % 128
        x = jnp.pad(x, ((0, 0), (0, 0), (0, pad)))
        tgt = jnp.pad(tgt, ((0, 0), (0, pad)), constant_values=-1)
        V += pad
    nv128 = V // 128

    x = x.reshape(B, C, nv128, 128)
    tgt = tgt.reshape(B, nv128, 128)

    # Large fixed spatial tile; ragged last tile masked in-kernel.
    if nv128 <= block_rows:
        S = nv128                    # single full-extent tile (any size allowed)
    else:
        S = block_rows               # e.g. 512 rows -> ~3 MiB f32 logits per step
    nt = _cdiv(nv128, S)
    n_outer = 2 if nt >= 2 else 1    # keep both v7x TensorCores busy
    nt_in = _cdiv(nt, n_outer)

    task_id = jnp.asarray(task_id, jnp.int32)
    meta = jnp.asarray(META_TABLE)[task_id]        # (B, 4)  int32 -> SMEM
    bgm = jnp.asarray(BGMASK_TABLE)[task_id]       # (B, 12) f32   -> SMEM

    kernel = _make_kernel(nv128=nv128, nt_in=nt_in, tile_rows=S,
                          unit_weights=_UNIT_WEIGHTS)
    if _UNIT_WEIGHTS:
        nsp = 2
        prefetch = (meta, bgm)
    else:
        nsp = 3
        prefetch = (meta, bgm, jnp.asarray(WCLS_TABLE)[task_id])

    def x_map(b, o, v, *_):
        return (b, 0, jnp.minimum(o * nt_in + v, nt - 1), 0)

    def t_map(b, o, v, *_):
        return (b, jnp.minimum(o * nt_in + v, nt - 1), 0)

    def o_map(b, o, v, *_):
        return (b * n_outer + o, 0, 0, 0)

    out = pl.pallas_call(
        kernel,
        out_shape=jax.ShapeDtypeStruct((B * n_outer, 2, S, 128), jnp.float32),
        grid_spec=pltpu.PrefetchScalarGridSpec(
            num_scalar_prefetch=nsp,
            grid=(B, n_outer, nt_in),
            in_specs=[
                pl.BlockSpec((None, C, S, 128), x_map),
                pl.BlockSpec((None, S, 128), t_map),
            ],
            out_specs=pl.BlockSpec((None, 2, S, 128), o_map),
        ),
        compiler_params=pltpu.CompilerParams(
            dimension_semantics=("parallel", "parallel", "arbitrary"),
            vmem_limit_bytes=32 * 1024 * 1024),
    )(*prefetch, x, tgt)

    out = out.reshape(B, n_outer, 2, S * 128)
    num = out[:, :, 0].sum(axis=(1, 2))   # per-sample sum of w[y] * CE
    den = out[:, :, 1].sum(axis=(1, 2))   # per-sample sum of w[y]
    return jnp.sum(num / den)


def tal_loss_reference(inputs, targets, task_id):
    """Pure-JAX replica of the PyTorch forward (weights = ones, norm=False)."""
    B = inputs.shape[0]
    loss = jnp.float32(0.0)
    for i in range(B):
        t = int(task_id[i])
        bg = np.array(TASK_BG[t])
        nbg = np.array(TASK_NBG[t])
        in1 = inputs[i, bg].sum(0, keepdims=True)
        in2 = inputs[i, nbg]
        logits = jnp.concatenate([in1, in2], axis=0).astype(jnp.float32)
        delta = -2.0 * t if t <= 4 else -float(t) - 4.0
        tg = targets[i].astype(jnp.float32)
        tg = jnp.where(tg > 0, tg + delta, tg).astype(jnp.int32)
        logp = jax.nn.log_softmax(logits, axis=0)
        onehot = jax.nn.one_hot(tg, logits.shape[0], axis=0, dtype=jnp.float32)
        nll = -(onehot * logp).sum(0)
        w = jnp.asarray(WEIGHTS[0])[np.array([0] + TASK_NBG[t])]
        w_t = (onehot * w[:, None, None, None]).sum(0)
        loss = loss + (w_t * nll).sum() / w_t.sum()
    return loss


if __name__ == "__main__":
    B, C, D, H, W = 2, 12, 4, 16, 16
    key = jax.random.PRNGKey(0)
    k1, k2, k3 = jax.random.split(key, 3)

    inputs = jax.random.normal(k1, (B, C, D, H, W), dtype=jnp.float32)

    task_id = np.array([1, 5], dtype=np.int32)
    # valid labels per sample: task 1 -> {0, 3, 4}, task 5 -> {0, 10}
    lab0 = jnp.array([0, 3, 4], jnp.int32)[jax.random.randint(k2, (D, H, W), 0, 3)]
    lab1 = jnp.array([0, 10], jnp.int32)[jax.random.randint(k3, (D, H, W), 0, 2)]
    targets = jnp.stack([lab0, lab1], axis=0).astype(jnp.float32)

    loss = jax.block_until_ready(tal_loss_pallas(inputs, targets, task_id))
    ref = jax.block_until_ready(tal_loss_reference(inputs, targets, task_id))
    np.testing.assert_allclose(np.asarray(loss), np.asarray(ref), rtol=1e-3, atol=1e-3)

    print("KERNEL_OK")
</pallas_src>

<mosaic_0001>
module attributes {stable_mosaic.version = 11 : i64} {
  func.func @kernel(%arg0: i32, %arg1: i32, %arg2: i32, %arg3: memref<2x4xi32, #tpu.memory_space<smem>>, %arg4: memref<2x12xf32, #tpu.memory_space<smem>>, %arg5: memref<1x12x8x128xf32, #tpu.memory_space<vmem>>, %arg6: memref<1x8x128xi8, #tpu.memory_space<vmem>>, %arg7: memref<1x2x8x128xf32, #tpu.memory_space<vmem>>) attributes {dimension_semantics = [#tpu.dimension_semantics<parallel>, #tpu.dimension_semantics<parallel>, #tpu.dimension_semantics<arbitrary>], iteration_bounds = array<i64: 2, 1, 1>, scalar_prefetch = 2 : i64, scratch_operands = 0 : i64, tpu.core_type = #tpu.core_type<tc>, window_params = [{transform_indices = @transform_0, window_bounds = array<i64: 1, 12, 8, 128>}, {transform_indices = @transform_1, window_bounds = array<i64: 1, 8, 128>}, {transform_indices = @transform_2, window_bounds = array<i64: 1, 2, 8, 128>}]} {
    %c0_i32 = arith.constant 0 : i32
    %0 = arith.cmpi eq, %arg2, %c0_i32 : i32
    %1 = arith.extui %0 : i1 to i32
    %c0_i32_0 = arith.constant 0 : i32
    %2 = arith.cmpi ne, %1, %c0_i32_0 : i32
    scf.if %2 {
      %cst = arith.constant 0.000000e+00 : f32
      %10 = vector.broadcast %cst : f32 to vector<2x8x128xf32>
      %c0 = arith.constant 0 : index
      %c0_4 = arith.constant 0 : index
      %c0_5 = arith.constant 0 : index
      %c0_6 = arith.constant 0 : index
      %11 = vector.load %arg7[%c0, %c0_4, %c0_5, %c0_6] : memref<1x2x8x128xf32, #tpu.memory_space<vmem>>, vector<1x2x8x128xf32>
      %12 = vector.shape_cast %11 : vector<1x2x8x128xf32> to vector<2x8x128xf32>
      %13 = vector.shape_cast %10 : vector<2x8x128xf32> to vector<1x2x8x128xf32>
      tpu.vector_store %arg7[%c0, %c0_4, %c0_5, %c0_6], %13 {strides = array<i32>} : memref<1x2x8x128xf32, #tpu.memory_space<vmem>>, vector<1x2x8x128xf32>,
    } else {
    }
    %c1_i32 = arith.constant 1 : i32
    %3 = arith.muli %arg1, %c1_i32 : i32
    %4 = arith.addi %3, %arg2 : i32
    %c8_i32 = arith.constant 8 : i32
    %5 = arith.muli %4, %c8_i32 : i32
    %c8_i32_1 = arith.constant 8 : i32
    %6 = arith.subi %c8_i32_1, %5 : i32
    %c0_i32_2 = arith.constant 0 : i32
    %7 = arith.cmpi sgt, %6, %c0_i32_2 : i32
    %8 = arith.extui %7 : i1 to i32
    %c0_i32_3 = arith.constant 0 : i32
    %9 = arith.cmpi ne, %8, %c0_i32_3 : i32
    scf.if %9 {
      %10 = arith.index_cast %arg0 : i32 to index
      %c0 = arith.constant 0 : index
      %11 = memref.load %arg3[%10, %c0] : memref<2x4xi32, #tpu.memory_space<smem>>
      %12 = arith.index_cast %arg0 : i32 to index
      %c1 = arith.constant 1 : index
      %13 = memref.load %arg3[%12, %c1] : memref<2x4xi32, #tpu.memory_space<smem>>
      %14 = arith.index_cast %arg0 : i32 to index
      %c2 = arith.constant 2 : index
      %15 = memref.load %arg3[%14, %c2] : memref<2x4xi32, #tpu.memory_space<smem>>
      %16 = arith.index_cast %arg0 : i32 to index
      %c3 = arith.constant 3 : index
      %17 = memref.load %arg3[%16, %c3] : memref<2x4xi32, #tpu.memory_space<smem>>
      %c2_i32 = arith.constant 2 : i32
      %18 = arith.cmpi eq, %17, %c2_i32 : i32
      %c0_4 = arith.constant 0 : index
      %c0_5 = arith.constant 0 : index
      %c0_6 = arith.constant 0 : index
      %c0_7 = arith.constant 0 : index
      %19 = vector.load %arg5[%c0_4, %c0_5, %c0_6, %c0_7] : memref<1x12x8x128xf32, #tpu.memory_space<vmem>>, vector<1x1x8x128xf32>
      %20 = vector.shape_cast %19 : vector<1x1x8x128xf32> to vector<8x128xf32>
      %c0_8 = arith.constant 0 : index
      %c1_9 = arith.constant 1 : index
      %c0_10 = arith.constant 0 : index
      %c0_11 = arith.constant 0 : index
      %21 = vector.load %arg5[%c0_8, %c1_9, %c0_10, %c0_11] : memref<1x12x8x128xf32, #tpu.memory_space<vmem>>, vector<1x1x8x128xf32>
      %22 = vector.shape_cast %21 : vector<1x1x8x128xf32> to vector<8x128xf32>
      %c0_12 = arith.constant 0 : index
      %c2_13 = arith.constant 2 : index
      %c0_14 = arith.constant 0 : index
      %c0_15 = arith.constant 0 : index
      %23 = vector.load %arg5[%c0_12, %c2_13, %c0_14, %c0_15] : memref<1x12x8x128xf32, #tpu.memory_space<vmem>>, vector<1x1x8x128xf32>
      %24 = vector.shape_cast %23 : vector<1x1x8x128xf32> to vector<8x128xf32>
      %c0_16 = arith.constant 0 : index
      %c3_17 = arith.constant 3 : index
      %c0_18 = arith.constant 0 : index
      %c0_19 = arith.constant 0 : index
      %25 = vector.load %arg5[%c0_16, %c3_17, %c0_18, %c0_19] : memref<1x12x8x128xf32, #tpu.memory_space<vmem>>, vector<1x1x8x128xf32>
      %26 = vector.shape_cast %25 : vector<1x1x8x128xf32> to vector<8x128xf32>
      %c0_20 = arith.constant 0 : index
      %c4 = arith.constant 4 : index
      %c0_21 = arith.constant 0 : index
      %c0_22 = arith.constant 0 : index
      %27 = vector.load %arg5[%c0_20, %c4, %c0_21, %c0_22] : memref<1x12x8x128xf32, #tpu.memory_space<vmem>>, vector<1x1x8x128xf32>
      %28 = vector.shape_cast %27 : vector<1x1x8x128xf32> to vector<8x128xf32>
      %c0_23 = arith.constant 0 : index
      %c5 = arith.constant 5 : index
      %c0_24 = arith.constant 0 : index
      %c0_25 = arith.constant 0 : index
      %29 = vector.load %arg5[%c0_23, %c5, %c0_24, %c0_25] : memref<1x12x8x128xf32, #tpu.memory_space<vmem>>, vector<1x1x8x128xf32>
      %30 = vector.shape_cast %29 : vector<1x1x8x128xf32> to vector<8x128xf32>
      %c0_26 = arith.constant 0 : index
      %c6 = arith.constant 6 : index
      %c0_27 = arith.constant 0 : index
      %c0_28 = arith.constant 0 : index
      %31 = vector.load %arg5[%c0_26, %c6, %c0_27, %c0_28] : memref<1x12x8x128xf32, #tpu.memory_space<vmem>>, vector<1x1x8x128xf32>
      %32 = vector.shape_cast %31 : vector<1x1x8x128xf32> to vector<8x128xf32>
      %c0_29 = arith.constant 0 : index
      %c7 = arith.constant 7 : index
      %c0_30 = arith.constant 0 : index
      %c0_31 = arith.constant 0 : index
      %33 = vector.load %arg5[%c0_29, %c7, %c0_30, %c0_31] : memref<1x12x8x128xf32, #tpu.memory_space<vmem>>, vector<1x1x8x128xf32>
      %34 = vector.shape_cast %33 : vector<1x1x8x128xf32> to vector<8x128xf32>
      %c0_32 = arith.constant 0 : index
      %c8 = arith.constant 8 : index
      %c0_33 = arith.constant 0 : index
      %c0_34 = arith.constant 0 : index
      %35 = vector.load %arg5[%c0_32, %c8, %c0_33, %c0_34] : memref<1x12x8x128xf32, #tpu.memory_space<vmem>>, vector<1x1x8x128xf32>
      %36 = vector.shape_cast %35 : vector<1x1x8x128xf32> to vector<8x128xf32>
      %c0_35 = arith.constant 0 : index
      %c9 = arith.constant 9 : index
      %c0_36 = arith.constant 0 : index
      %c0_37 = arith.constant 0 : index
      %37 = vector.load %arg5[%c0_35, %c9, %c0_36, %c0_37] : memref<1x12x8x128xf32, #tpu.memory_space<vmem>>, vector<1x1x8x128xf32>
      %38 = vector.shape_cast %37 : vector<1x1x8x128xf32> to vector<8x128xf32>
      %c0_38 = arith.constant 0 : index
      %c10 = arith.constant 10 : index
      %c0_39 = arith.constant 0 : index
      %c0_40 = arith.constant 0 : index
      %39 = vector.load %arg5[%c0_38, %c10, %c0_39, %c0_40] : memref<1x12x8x128xf32, #tpu.memory_space<vmem>>, vector<1x1x8x128xf32>
      %40 = vector.shape_cast %39 : vector<1x1x8x128xf32> to vector<8x128xf32>
      %c0_41 = arith.constant 0 : index
      %c11 = arith.constant 11 : index
      %c0_42 = arith.constant 0 : index
      %c0_43 = arith.constant 0 : index
      %41 = vector.load %arg5[%c0_41, %c11, %c0_42, %c0_43] : memref<1x12x8x128xf32, #tpu.memory_space<vmem>>, vector<1x1x8x128xf32>
      %42 = vector.shape_cast %41 : vector<1x1x8x128xf32> to vector<8x128xf32>
      %43 = arith.index_cast %arg0 : i32 to index
      %c0_44 = arith.constant 0 : index
      %44 = memref.load %arg4[%43, %c0_44] : memref<2x12xf32, #tpu.memory_space<smem>>
      %45 = vector.broadcast %44 : f32 to vector<8x128xf32>
      %46 = arith.mulf %45, %20 : vector<8x128xf32>
      %47 = arith.index_cast %arg0 : i32 to index
      %c1_45 = arith.constant 1 : index
      %48 = memref.load %arg4[%47, %c1_45] : memref<2x12xf32, #tpu.memory_space<smem>>
      %49 = vector.broadcast %48 : f32 to vector<8x128xf32>
      %50 = arith.mulf %49, %22 : vector<8x128xf32>
      %51 = arith.index_cast %arg0 : i32 to index
      %c2_46 = arith.constant 2 : index
      %52 = memref.load %arg4[%51, %c2_46] : memref<2x12xf32, #tpu.memory_space<smem>>
      %53 = vector.broadcast %52 : f32 to vector<8x128xf32>
      %54 = arith.mulf %53, %24 : vector<8x128xf32>
      %55 = arith.index_cast %arg0 : i32 to index
      %c3_47 = arith.constant 3 : index
      %56 = memref.load %arg4[%55, %c3_47] : memref<2x12xf32, #tpu.memory_space<smem>>
      %57 = vector.broadcast %56 : f32 to vector<8x128xf32>
      %58 = arith.mulf %57, %26 : vector<8x128xf32>
      %59 = arith.index_cast %arg0 : i32 to index
      %c4_48 = arith.constant 4 : index
      %60 = memref.load %arg4[%59, %c4_48] : memref<2x12xf32, #tpu.memory_space<smem>>
      %61 = vector.broadcast %60 : f32 to vector<8x128xf32>
      %62 = arith.mulf %61, %28 : vector<8x128xf32>
      %63 = arith.index_cast %arg0 : i32 to index
      %c5_49 = arith.constant 5 : index
      %64 = memref.load %arg4[%63, %c5_49] : memref<2x12xf32, #tpu.memory_space<smem>>
      %65 = vector.broadcast %64 : f32 to vector<8x128xf32>
      %66 = arith.mulf %65, %30 : vector<8x128xf32>
      %67 = arith.index_cast %arg0 : i32 to index
      %c6_50 = arith.constant 6 : index
      %68 = memref.load %arg4[%67, %c6_50] : memref<2x12xf32, #tpu.memory_space<smem>>
      %69 = vector.broadcast %68 : f32 to vector<8x128xf32>
      %70 = arith.mulf %69, %32 : vector<8x128xf32>
      %71 = arith.index_cast %arg0 : i32 to index
      %c7_51 = arith.constant 7 : index
      %72 = memref.load %arg4[%71, %c7_51] : memref<2x12xf32, #tpu.memory_space<smem>>
      %73 = vector.broadcast %72 : f32 to vector<8x128xf32>
      %74 = arith.mulf %73, %34 : vector<8x128xf32>
      %75 = arith.index_cast %arg0 : i32 to index
      %c8_52 = arith.constant 8 : index
      %76 = memref.load %arg4[%75, %c8_52] : memref<2x12xf32, #tpu.memory_space<smem>>
      %77 = vector.broadcast %76 : f32 to vector<8x128xf32>
      %78 = arith.mulf %77, %36 : vector<8x128xf32>
      %79 = arith.index_cast %arg0 : i32 to index
      %c9_53 = arith.constant 9 : index
      %80 = memref.load %arg4[%79, %c9_53] : memref<2x12xf32, #tpu.memory_space<smem>>
      %81 = vector.broadcast %80 : f32 to vector<8x128xf32>
      %82 = arith.mulf %81, %38 : vector<8x128xf32>
      %83 = arith.index_cast %arg0 : i32 to index
      %c10_54 = arith.constant 10 : index
      %84 = memref.load %arg4[%83, %c10_54] : memref<2x12xf32, #tpu.memory_space<smem>>
      %85 = vector.broadcast %84 : f32 to vector<8x128xf32>
      %86 = arith.mulf %85, %40 : vector<8x128xf32>
      %87 = arith.index_cast %arg0 : i32 to index
      %c11_55 = arith.constant 11 : index
      %88 = memref.load %arg4[%87, %c11_55] : memref<2x12xf32, #tpu.memory_space<smem>>
      %89 = vector.broadcast %88 : f32 to vector<8x128xf32>
      %90 = arith.mulf %89, %42 : vector<8x128xf32>
      %91 = arith.addf %46, %50 : vector<8x128xf32>
      %92 = arith.addf %54, %58 : vector<8x128xf32>
      %93 = arith.addf %62, %66 : vector<8x128xf32>
      %94 = arith.addf %70, %74 : vector<8x128xf32>
      %95 = arith.addf %78, %82 : vector<8x128xf32>
      %96 = arith.addf %86, %90 : vector<8x128xf32>
      %97 = arith.addf %91, %92 : vector<8x128xf32>
      %98 = arith.addf %93, %94 : vector<8x128xf32>
      %99 = arith.addf %95, %96 : vector<8x128xf32>
      %100 = arith.addf %97, %98 : vector<8x128xf32>
      %101 = arith.addf %100, %99 : vector<8x128xf32>
      %c0_56 = arith.constant 0 : index
      %102 = arith.index_cast %11 : i32 to index
      %c0_57 = arith.constant 0 : index
      %c0_58 = arith.constant 0 : index
      %103 = vector.load %arg5[%c0_56, %102, %c0_57, %c0_58] : memref<1x12x8x128xf32, #tpu.memory_space<vmem>>, vector<1x1x8x128xf32>
      %104 = vector.shape_cast %103 : vector<1x1x8x128xf32> to vector<8x128xf32>
      %c0_59 = arith.constant 0 : index
      %105 = arith.index_cast %13 : i32 to index
      %c0_60 = arith.constant 0 : index
      %c0_61 = arith.constant 0 : index
      %106 = vector.load %arg5[%c0_59, %105, %c0_60, %c0_61] : memref<1x12x8x128xf32, #tpu.memory_space<vmem>>, vector<1x1x8x128xf32>
      %107 = vector.shape_cast %106 : vector<1x1x8x128xf32> to vector<8x128xf32>
      %cst = arith.constant -1.000000e+30 : f32
      %108 = vector.broadcast %cst : f32 to vector<8x128xf32>
      %109 = arith.select %18, %107, %108 : vector<8x128xf32>
      %110 = arith.maximumf %101, %104 : vector<8x128xf32>
      %111 = arith.maximumf %110, %109 : vector<8x128xf32>
      %112 = arith.subf %101, %111 : vector<8x128xf32>
      %113 = math.exp %112 : vector<8x128xf32>
      %114 = arith.subf %104, %111 : vector<8x128xf32>
      %115 = math.exp %114 : vector<8x128xf32>
      %116 = arith.addf %113, %115 : vector<8x128xf32>
      %117 = arith.subf %109, %111 : vector<8x128xf32>
      %118 = math.exp %117 : vector<8x128xf32>
      %119 = arith.addf %116, %118 : vector<8x128xf32>
      %120 = math.log %119 : vector<8x128xf32>
      %121 = arith.addf %111, %120 : vector<8x128xf32>
      %c0_62 = arith.constant 0 : index
      %c0_63 = arith.constant 0 : index
      %c0_64 = arith.constant 0 : index
      %122 = vector.load %arg6[%c0_62, %c0_63, %c0_64] : memref<1x8x128xi8, #tpu.memory_space<vmem>>, vector<1x8x128xi8>
      %123 = vector.shape_cast %122 : vector<1x8x128xi8> to vector<8x128xi8>
      %124 = arith.extsi %123 : vector<8x128xi8> to vector<8x128xi32>
      %c0_i32_65 = arith.constant 0 : i32
      %125 = vector.broadcast %c0_i32_65 : i32 to vector<8x128xi32>
      %126 = arith.cmpi sgt, %124, %125 : vector<8x128xi32>
      %127 = vector.broadcast %15 : i32 to vector<8x128xi32>
      %128 = arith.addi %124, %127 : vector<8x128xi32>
      %129 = arith.select %126, %128, %124 : vector<8x128xi1>, vector<8x128xi32>
      %c1_i32_66 = arith.constant 1 : i32
      %130 = vector.broadcast %c1_i32_66 : i32 to vector<8x128xi32>
      %131 = arith.cmpi eq, %129, %130 : vector<8x128xi32>
      %c2_i32_67 = arith.constant 2 : i32
      %132 = vector.broadcast %c2_i32_67 : i32 to vector<8x128xi32>
      %133 = arith.cmpi eq, %129, %132 : vector<8x128xi32>
      %134 = arith.select %133, %107, %101 : vector<8x128xi1>, vector<8x128xf32>
      %135 = arith.select %131, %104, %134 : vector<8x128xi1>, vector<8x128xf32>
      %c0_i32_68 = arith.constant 0 : i32
      %136 = vector.broadcast %c0_i32_68 : i32 to vector<8x128xi32>
      %137 = arith.cmpi sge, %129, %136 : vector<8x128xi32>
      %138 = vector.broadcast %17 : i32 to vector<8x128xi32>
      %139 = arith.cmpi sle, %129, %138 : vector<8x128xi32>
      %140 = arith.andi %137, %139 : vector<8x128xi1>
      %141 = arith.extui %140 : vector<8x128xi1> to vector<8x128xi32>
      %142 = arith.sitofp %141 : vector<8x128xi32> to vector<8x128xf32>
      %143 = arith.subf %121, %135 : vector<8x128xf32>
      %144 = tpu.iota {dimensions = array<i32: 0>} : vector<8x128xi32>
      %145 = vector.broadcast %6 : i32 to vector<8x128xi32>
      %146 = arith.cmpi slt, %144, %145 : vector<8x128xi32>
      %c0_69 = arith.constant 0 : index
      %c0_70 = arith.constant 0 : index
      %c0_71 = arith.constant 0 : index
      %c0_72 = arith.constant 0 : index
      %147 = vector.load %arg7[%c0_69, %c0_70, %c0_71, %c0_72] : memref<1x2x8x128xf32, #tpu.memory_space<vmem>>, vector<1x1x8x128xf32>
      %148 = vector.shape_cast %147 : vector<1x1x8x128xf32> to vector<8x128xf32>
      %149 = arith.mulf %142, %143 : vector<8x128xf32>
      %cst_73 = arith.constant 0.000000e+00 : f32
      %150 = vector.broadcast %cst_73 : f32 to vector<8x128xf32>
      %151 = arith.select %146, %149, %150 : vector<8x128xi1>, vector<8x128xf32>
      %152 = arith.addf %148, %151 : vector<8x128xf32>
      %c0_74 = arith.constant 0 : index
      %c0_75 = arith.constant 0 : index
      %c0_76 = arith.constant 0 : index
      %c0_77 = arith.constant 0 : index
      %153 = vector.load %arg7[%c0_74, %c0_75, %c0_76, %c0_77] : memref<1x2x8x128xf32, #tpu.memory_space<vmem>>, vector<1x1x8x128xf32>
      %154 = vector.shape_cast %153 : vector<1x1x8x128xf32> to vector<8x128xf32>
      %155 = vector.shape_cast %152 : vector<8x128xf32> to vector<1x1x8x128xf32>
      tpu.vector_store %arg7[%c0_74, %c0_75, %c0_76, %c0_77], %155 {strides = array<i32>} : memref<1x2x8x128xf32, #tpu.memory_space<vmem>>, vector<1x1x8x128xf32>,
      %c0_78 = arith.constant 0 : index
      %c1_79 = arith.constant 1 : index
      %c0_80 = arith.constant 0 : index
      %c0_81 = arith.constant 0 : index
      %156 = vector.load %arg7[%c0_78, %c1_79, %c0_80, %c0_81] : memref<1x2x8x128xf32, #tpu.memory_space<vmem>>, vector<1x1x8x128xf32>
      %157 = vector.shape_cast %156 : vector<1x1x8x128xf32> to vector<8x128xf32>
      %cst_82 = arith.constant 0.000000e+00 : f32
      %158 = vector.broadcast %cst_82 : f32 to vector<8x128xf32>
      %159 = arith.select %146, %142, %158 : vector<8x128xi1>, vector<8x128xf32>
      %160 = arith.addf %157, %159 : vector<8x128xf32>
      %c0_83 = arith.constant 0 : index
      %c1_84 = arith.constant 1 : index
      %c0_85 = arith.constant 0 : index
      %c0_86 = arith.constant 0 : index
      %161 = vector.load %arg7[%c0_83, %c1_84, %c0_85, %c0_86] : memref<1x2x8x128xf32, #tpu.memory_space<vmem>>, vector<1x1x8x128xf32>
      %162 = vector.shape_cast %161 : vector<1x1x8x128xf32> to vector<8x128xf32>
      %163 = vector.shape_cast %160 : vector<8x128xf32> to vector<1x1x8x128xf32>
      tpu.vector_store %arg7[%c0_83, %c1_84, %c0_85, %c0_86], %163 {strides = array<i32>} : memref<1x2x8x128xf32, #tpu.memory_space<vmem>>, vector<1x1x8x128xf32>,
    } else {
    }
    return
  }
  func.func @transform_0(%arg0: i32, %arg1: i32, %arg2: i32, %arg3: memref<2x4xi32, #tpu.memory_space<smem>>, %arg4: memref<2x12xf32, #tpu.memory_space<smem>>) -> (i32, i32, i32, i32) {
    %c1_i32 = arith.constant 1 : i32
    %0 = arith.muli %arg1, %c1_i32 : i32
    %1 = arith.addi %0, %arg2 : i32
    %c0_i32 = arith.constant 0 : i32
    %2 = arith.minsi %1, %c0_i32 : i32
    %c0_i32_0 = arith.constant 0 : i32
    %c0_i32_1 = arith.constant 0 : i32
    %c0_i32_2 = arith.constant 0 : i32
    return %arg0, %c0_i32_0, %2, %c0_i32_1 : i32, i32, i32, i32
  }
  func.func @transform_1(%arg0: i32, %arg1: i32, %arg2: i32, %arg3: memref<2x4xi32, #tpu.memory_space<smem>>, %arg4: memref<2x12xf32, #tpu.memory_space<smem>>) -> (i32, i32, i32) {
    %c1_i32 = arith.constant 1 : i32
    %0 = arith.muli %arg1, %c1_i32 : i32
    %1 = arith.addi %0, %arg2 : i32
    %c0_i32 = arith.constant 0 : i32
    %2 = arith.minsi %1, %c0_i32 : i32
    %c0_i32_0 = arith.constant 0 : i32
    %c0_i32_1 = arith.constant 0 : i32
    return %arg0, %2, %c0_i32_0 : i32, i32, i32
  }
  func.func @transform_2(%arg0: i32, %arg1: i32, %arg2: i32, %arg3: memref<2x4xi32, #tpu.memory_space<smem>>, %arg4: memref<2x12xf32, #tpu.memory_space<smem>>) -> (i32, i32, i32, i32) {
    %c1_i32 = arith.constant 1 : i32
    %0 = arith.muli %arg0, %c1_i32 : i32
    %1 = arith.addi %0, %arg1 : i32
    %c0_i32 = arith.constant 0 : i32
    %c0_i32_0 = arith.constant 0 : i32
    %c0_i32_1 = arith.constant 0 : i32
    %c0_i32_2 = arith.constant 0 : i32
    return %1, %c0_i32, %c0_i32_0, %c0_i32_1 : i32, i32, i32, i32
  }
}

</mosaic_0001>

<llo_original>
// kernel: tpu_custom_call.1
$region0: #{tpu_custom_call.1}
  #allocation0 [shape = 'u32[]', space=smem, size = 0x4, offset = 0x4, fixed_abs, tag = 'smem constant byte address 0x4 - core index']
  #allocation1 [shape = 'u32[144,128]{1,0:T(1,128)}', space=vmem, size = 0x12000, scoped, tag = 'internal scratch']
  #allocation2 [shape = 's32[1]{0}', space=sflag, size = 0x4, scoped, tag = 'scoped memory for tpu_custom_call.1']
  #allocation3 [shape = 'u8[1024]{0}', space=smem, size = 0x400, scoped, tag = 'prefetched SMEM operand 0']
  #allocation4 [shape = 'u8[1024]{0}', space=smem, size = 0x400, scoped, tag = 'prefetched SMEM operand 1']
  %s0 = inlined_call_operand.hbm [shape: s32[2,4], index: 0, kind: input, shape index: {}]
  %s1 = inlined_call_operand.hbm [shape: f32[2,12], index: 1, kind: input, shape index: {}]
  %s2 = inlined_call_operand.hbm [shape: f32[2,12,8,128], index: 2, kind: input, shape index: {}]
  %s3 = inlined_call_operand.vmem [shape: s8[2,8,128], index: 3, kind: input, shape index: {}]
  %s4 = inlined_call_operand.hbm [shape: f32[2,2,8,128], index: 4, kind: output, shape index: {}]
  %s5 = sld [smem:[#allocation0]]
  $region53: #{tpu_custom_call.1} parent=0
    _
  %s7 = ssub.s32 1, %s5
  %s8 = scalar_select 0, %s7, %s5
  %10 = dma.hbm_to_smem %s0, 32, [#allocation3], [#allocation2]
  %12 = dma.hbm_to_smem %s1, 32, [#allocation4], [#allocation2]
  %13 = dma.done [#allocation2], 64
  %14 = sfence
  $region1: #{tpu_custom_call.1} parent=0
    #allocation5 [shape = 'u8[98304]{0}', space=vmem, size = 0x18000, scoped, tag = 'input window, operand 2']
    #allocation6 [shape = 's32[2]{0}', space=sflag, size = 0x8, scoped, tag = 'scoped memory for tpu_custom_call.1']
    #allocation7 [shape = 's32[2]{0}', space=sflag, size = 0x8, scoped, tag = 'scoped memory for tpu_custom_call.1']
    #allocation8 [shape = 'u8[16384]{0}', space=vmem, size = 0x4000, scoped, tag = 'output window, operand 0']
    %15 = vsyncpa [#allocation6], 0
    %s16 = scalar_lea.sflag [#allocation6], 1
    %17 = vsyncpa %s16, 0
    %18 = vsyncpa [#allocation7], 0
    %s19 = scalar_lea.sflag [#allocation7], 1
    %20 = vsyncpa %s19, 0
    loop: start=0, step=1, limit=4
    $region2: #{tpu_custom_call.1} parent=1 // loop_pre_header
      _
    $region3: #{tpu_custom_call.1} parent=1 // loop_header
      %s22 = sphi 0, %s26
      %p23 = scmp.ge.s32.totalorder %s22, 4
      %s29 = sphi 0, %s48
      %s30 = sphi 0, %s44
      %s31 = sphi 0, %s40
      %s32 = sphi 0, %s29
      %s33 = sphi 0, %s30
      %s34 = sphi 0, %s31
      %s35 = sphi 0, %s32
      %s36 = sphi 0, %s33
      %s37 = sphi 0, %s34
      %s59 = sphi 0, %s61
      %s62 = sphi 0, %s59
      %s63 = sphi 0, %s62
      %s79 = sphi 0, %s63
      %s93 = sphi 0, %s95
      %s96 = sphi 0, %s93
      %s97 = sphi 0, %s96
      %s113 = sphi 0, %s97
      %s121 = sphi 0, %s123
      %s124 = sphi 0, %s121
      %s125 = sphi 0, %s124
      %s141 = sphi 0, %s125
    $region4: #{tpu_custom_call.1} parent=1 // loop_header_branch
      %25 = sbr.rel (%p23) target = $region8
    $region5: #{tpu_custom_call.1} parent=1 // loop_body
      %s27 = ssub.s32 %s22, 1
      %s28 = ssub.s32 %s22, 2
      %s38 = sadd.s32 1, %s31
      %p39 = scmp.ge.s32.totalorder %s38, 1
      %s40 = scalar_select %p39, 0, %s38
      %s41 = sadd.s32 1, %s30
      %s42 = scalar_select %p39, %s41, %s30
      %p43 = scmp.ge.s32.totalorder %s42, 1
      %s44 = scalar_select %p43, 0, %s42
      %s45 = sadd.s32 1, %s29
      %s46 = scalar_select %p43, %s45, %s29
      %p47 = scmp.ge.s32.totalorder %s46, 2
      %s48 = scalar_select %p47, 0, %s46
      %s49 = sadd.s32 %s30, %s31
      %p50 = scmp.lt.s32.totalorder %s49, 0
      %s51 = scalar_select %p50, %s49, 0
      %s52 = sadd.s32 %s44, %s40
      %p53 = scmp.lt.s32.totalorder %s52, 0
      %s54 = scalar_select %p53, %s52, 0
      %s55 = ssub.s32 %s29, %s48
      %s56 = ssub.s32 %s51, %s54
      %s57 = sor.u32 %s55, %s56
      %p58 = scmp.eq.s32.totalorder %s57, 0
      %s60 = sadd.s32 %s59, 1
      %s61 = scalar_select %p58, %s59, %s60
      %p64 = pneg %p58
      %p65 = scmp.eq.s32.totalorder %s22, 1
      %p66 = por %p64, %p65
      %p67 = scmp.ne.s32.totalorder %s59, %s62
      %p68 = scmp.eq.s32.totalorder %s22, 0
      %p69 = por %p67, %p68
      %p70 = scmp.ne.s32.totalorder %s59, %s62
      %p71 = scmp.eq.s32.totalorder %s27, 1
      %p72 = por %p70, %p71
      %p73 = scmp.ne.s32.totalorder %s62, %s63
      %p74 = scmp.eq.s32.totalorder %s27, 0
      %p75 = por %p73, %p74
      %p76 = scmp.ne.s32.totalorder %s62, %s63
      %p77 = scmp.eq.s32.totalorder %s28, 1
      %p78 = por %p76, %p77
      %p80 = scmp.ne.s32.totalorder %s63, %s79
      %p81 = scmp.eq.s32.totalorder %s28, 0
      %p82 = por %p80, %p81
      %s83 = sadd.s32 %s30, %s31
      %p84 = scmp.lt.s32.totalorder %s83, 0
      %s85 = scalar_select %p84, %s83, 0
      %s86 = sadd.s32 %s44, %s40
      %p87 = scmp.lt.s32.totalorder %s86, 0
      %s88 = scalar_select %p87, %s86, 0
      %s89 = ssub.s32 %s29, %s48
      %s90 = ssub.s32 %s85, %s88
      %s91 = sor.u32 %s89, %s90
      %p92 = scmp.eq.s32.totalorder %s91, 0
      %s94 = sadd.s32 %s93, 1
      %s95 = scalar_select %p92, %s93, %s94
      %p98 = pneg %p92
      %p99 = scmp.eq.s32.totalorder %s22, 1
      %p100 = por %p98, %p99
      %p101 = scmp.ne.s32.totalorder %s93, %s96
      %p102 = scmp.eq.s32.totalorder %s22, 0
      %p103 = por %p101, %p102
      %p104 = scmp.ne.s32.totalorder %s93, %s96
      %p105 = scmp.eq.s32.totalorder %s27, 1
      %p106 = por %p104, %p105
      %p107 = scmp.ne.s32.totalorder %s96, %s97
      %p108 = scmp.eq.s32.totalorder %s27, 0
      %p109 = por %p107, %p108
      %p110 = scmp.ne.s32.totalorder %s96, %s97
      %p111 = scmp.eq.s32.totalorder %s28, 1
      %p112 = por %p110, %p111
      %p114 = scmp.ne.s32.totalorder %s97, %s113
      %p115 = scmp.eq.s32.totalorder %s28, 0
      %p116 = por %p114, %p115
      %s117 = sadd.s32 %s29, %s30
      %s118 = sadd.s32 %s48, %s44
      %s119 = ssub.s32 %s117, %s118
      %p120 = scmp.eq.s32.totalorder %s119, 0
      %s122 = sadd.s32 %s121, 1
      %s123 = scalar_select %p120, %s121, %s122
      %p126 = pneg %p120
      %p127 = scmp.eq.s32.totalorder %s22, 1
      %p128 = por %p126, %p127
      %p129 = scmp.ne.s32.totalorder %s121, %s124
      %p130 = scmp.eq.s32.totalorder %s22, 0
      %p131 = por %p129, %p130
      %p132 = scmp.ne.s32.totalorder %s121, %s124
      %p133 = scmp.eq.s32.totalorder %s27, 1
      %p134 = por %p132, %p133
      %p135 = scmp.ne.s32.totalorder %s124, %s125
      %p136 = scmp.eq.s32.totalorder %s27, 0
      %p137 = por %p135, %p136
      %p138 = scmp.ne.s32.totalorder %s124, %s125
      %p139 = scmp.eq.s32.totalorder %s28, 1
      %p140 = por %p138, %p139
      %p142 = scmp.ne.s32.totalorder %s125, %s141
      %p143 = scmp.eq.s32.totalorder %s28, 0
      %p144 = por %p142, %p143
      %p145 = scmp.le.s32.totalorder 1, %s22
      %p146 = scmp.lt.s32.totalorder %s22, 3
      %p147 = pnand %p145, %p146
      %p148 = pneg %p147
      // Predicated region
      $region9: #{tpu_custom_call.1} parent=5 // pred_check
        _
      $region10: #{tpu_custom_call.1} parent=5 // pred_check_branch
        %150 = sbr.rel (%p147) target = $region12
      $region11: #{tpu_custom_call.1} parent=5 // pred_region
        %s151 = ssub.s32 %s22, 1
      $region12: #{tpu_custom_call.1} parent=5 // pred_fallthru
        _
      %p152 = scmp.lt.s32.totalorder %s22, 2
      // Predicated region
      $region13: #{tpu_custom_call.1} parent=5 // pred_check
        %p153 = pneg %p152
      $region14: #{tpu_custom_call.1} parent=5 // pred_check_branch
        %155 = sbr.rel (%p153) target = $region16
      $region15: #{tpu_custom_call.1} parent=5 // pred_region
        // Predicated region
        $region17: #{tpu_custom_call.1} parent=15 // pred_check
          %p156 = pneg %p69
        $region18: #{tpu_custom_call.1} parent=15 // pred_check_branch
          %158 = sbr.rel (%p156) target = $region20
        $region19: #{tpu_custom_call.1} parent=15 // pred_region
          %s159 = sand.u32 %s59, 1
          %s160 = scalar_lea.sflag [#allocation6], %s159
          %s161 = sand.u32 %s59, 1
          %s162 = smul.addr %s161, 96
          %s163 = scalar_lea.vmem [#allocation5], %s162
          %s164 = sadd.s32 %s30, %s31
          %p165 = scmp.lt.s32.totalorder %s164, 0
          %s166 = scalar_select %p165, %s164, 0
          %s168 = ssub.s32 1536, 1536
          %169 = vsyncadd %s160, %s168
          %s170 = smul.addr %s29, 12
          %s171 = sadd.s32 %s166, %s170
          %s172 = smul.addr %s171, 128
          %s173 = scalar_lea.hbm %s2, %s172
          %s174 = sshll.u32 %s163, 4
          %s175 = int_to_ptr.vmem [resolvable:$true] %s174
          %180 = dma.hbm_to_vmem [thread:$0]  %s173, 1536, %s175, %s160, 128, 128, 8
        $region20: #{tpu_custom_call.1} parent=15 // pred_fallthru
          _
        // Predicated region
        $region21: #{tpu_custom_call.1} parent=15 // pred_check
          %p181 = pneg %p103
        $region22: #{tpu_custom_call.1} parent=15 // pred_check_branch
          %183 = sbr.rel (%p181) target = $region24
        $region23: #{tpu_custom_call.1} parent=15 // pred_region
          %s184 = sadd.s32 %s30, %s31
          %p185 = scmp.lt.s32.totalorder %s184, 0
          %s186 = scalar_select %p185, %s184, 0
          %p187 = scmp.lt.s32.totalorder %s29, 1
          %s188 = scalar_select %p187, %s29, 1
          %p189 = scmp.lt.s32.totalorder %s186, 0
          %s190 = scalar_select %p189, %s186, 0
          %s191 = sadd.s32 %s190, %s188
          %s192 = smul.addr %s191, 2
          %s193 = scalar_lea.vmem %s3, %s192
          %s194 = sadd.s32 %s30, %s31
          %p195 = scmp.lt.s32.totalorder %s194, 0
          %s196 = scalar_select %p195, %s194, 0
        $region24: #{tpu_custom_call.1} parent=15 // pred_fallthru
          _
      $region16: #{tpu_custom_call.1} parent=5 // pred_fallthru
        _
      %p197 = scmp.le.s32.totalorder 1, %s22
      %p198 = scmp.lt.s32.totalorder %s22, 3
      %p199 = pnand %p197, %p198
      %p200 = pneg %p199
      // Predicated region
      $region25: #{tpu_custom_call.1} parent=5 // pred_check
        _
      $region26: #{tpu_custom_call.1} parent=5 // pred_check_branch
        %202 = sbr.rel (%p199) target = $region28
      $region27: #{tpu_custom_call.1} parent=5 // pred_region
        %s203 = ssub.s32 %s22, 1
        %s204 = sand.u32 %s62, 1
        %s205 = scalar_lea.sflag [#allocation6], %s204
        %s206 = sand.u32 %s62, 1
        %s207 = smul.addr %s206, 96
        %s208 = scalar_lea.vmem [#allocation5], %s207
        // Predicated region
        $region29: #{tpu_custom_call.1} parent=27 // pred_check
          %p209 = pneg %p75
        $region30: #{tpu_custom_call.1} parent=27 // pred_check_branch
          %211 = sbr.rel (%p209) target = $region32
        $region31: #{tpu_custom_call.1} parent=27 // pred_region
          %212 = dma.done %s205, 1536
        $region32: #{tpu_custom_call.1} parent=27 // pred_fallthru
          _
        %s213 = sand.u32 %s62, 1
        %s214 = scalar_lea.sflag [#allocation6], %s213
        %s215 = sand.u32 %s62, 1
        %s216 = smul.addr %s215, 96
        %s217 = scalar_lea.vmem [#allocation5], %s216
        %p218 = pneg %p75
        %p219 = pneg %p72
        %s220 = sadd.s32 %s33, %s34
        %p221 = scmp.lt.s32.totalorder %s220, 0
        %s222 = scalar_select %p221, %s220, 0
        %p223 = scmp.lt.s32.totalorder %s32, 1
        %s224 = scalar_select %p223, %s32, 1
        %p225 = scmp.lt.s32.totalorder %s222, 0
        %s226 = scalar_select %p225, %s222, 0
        %s227 = sadd.s32 %s226, %s224
        %s228 = smul.addr %s227, 2
        %s229 = scalar_lea.vmem %s3, %s228
        %p230 = pneg %p109
        %p231 = pneg %p106
        %p232 = pneg %p137
        %p233 = pneg %p134
        %s234 = sand.u32 %s124, 1
        %s235 = scalar_lea.sflag [#allocation7], %s234
        %s236 = sand.u32 %s124, 1
        %s237 = smul.addr %s236, 16
        %s238 = scalar_lea.vmem [#allocation8], %s237
        %s239 = sadd.s32 %s33, %s34
        %p240 = scmp.lt.s32.totalorder %s239, 0
        %s241 = scalar_select %p240, %s239, 0
        %s242 = sadd.s32 %s33, %s34
        %p243 = scmp.lt.s32.totalorder %s242, 0
        %s244 = scalar_select %p243, %s242, 0
        %p245 = scmp.lt.s32.totalorder %s32, 1
        %s246 = scalar_select %p245, %s32, 1
        %p247 = scmp.lt.s32.totalorder %s244, 0
        %s248 = scalar_select %p247, %s244, 0
        %s249 = sadd.s32 %s248, %s246
        %s250 = smul.addr %s249, 2
        %s251 = scalar_lea.vmem %s3, %s250
        %s252 = sadd.s32 %s33, %s34
        %p253 = scmp.lt.s32.totalorder %s252, 0
        %s254 = scalar_select %p253, %s252, 0
        %s255 = sadd.s32 %s32, %s33
        %p256 = scmp.eq.s32.totalorder %s34, 0
        // Predicated region
        $region33: #{tpu_custom_call.1} parent=27 // pred_check
          %p257 = pneg %p256
        $region34: #{tpu_custom_call.1} parent=27 // pred_check_branch
          %259 = sbr.rel (%p257) target = $region36
        $region35: #{tpu_custom_call.1} parent=27 // pred_region
          %260 = vst [vmem:[%s238] sm:$0xff] 0.0
          %261 = vst [vmem:[%s238 + $0x8] sm:$0xff] 0.0
        $region36: #{tpu_custom_call.1} parent=27 // pred_fallthru
          _
        %s262 = sadd.s32 %s33, %s34
        %s263 = smul.u32 %s262, 8
        %s264 = ssub.s32 8, %s263
        %p265 = scmp.gt.s32.totalorder %s264, 0
        // Predicated region
        $region37: #{tpu_custom_call.1} parent=27 // pred_check
          %p266 = pneg %p265
        $region38: #{tpu_custom_call.1} parent=27 // pred_check_branch
          %268 = sbr.rel (%p266) target = $region40
        $region39: #{tpu_custom_call.1} parent=27 // pred_region
          %s269 = smul.u32 %s32, 128
          %s270 = sld [smem:[#allocation3 + %s269]]
          %s271 = sadd.s32 %s269, 1
          %s272 = sld [smem:[#allocation3 + %s271]]
          %s273 = sadd.s32 %s269, 2
          %s274 = sld [smem:[#allocation3 + %s273]]
          %s275 = sadd.s32 %s269, 3
          %s276 = sld [smem:[#allocation3 + %s275]]
          %p277 = scmp.eq.s32.totalorder %s276, 2
          %v278 = vld [vmem:[%s208] sm:$0xff]
          %s279 = scalar_lea.vmem %s208, 8 [#allocation5]
          %v280 = vld [vmem:[%s279] sm:$0xff]
          %s281 = scalar_lea.vmem %s208, 16 [#allocation5]
          %v282 = vld [vmem:[%s281] sm:$0xff]
          %s283 = scalar_lea.vmem %s208, 24 [#allocation5]
          %v284 = vld [vmem:[%s283] sm:$0xff]
          %s285 = scalar_lea.vmem %s208, 32 [#allocation5]
          %v286 = vld [vmem:[%s285] sm:$0xff]
          %s287 = scalar_lea.vmem %s208, 40 [#allocation5]
          %v288 = vld [vmem:[%s287] sm:$0xff]
          %s289 = scalar_lea.vmem %s208, 48 [#allocation5]
          %v290 = vld [vmem:[%s289] sm:$0xff]
          %s291 = scalar_lea.vmem %s208, 56 [#allocation5]
          %v292 = vld [vmem:[%s291] sm:$0xff]
          %s293 = scalar_lea.vmem %s208, 64 [#allocation5]
          %v294 = vld [vmem:[%s293] sm:$0xff]
          %s295 = scalar_lea.vmem %s208, 72 [#allocation5]
          %v296 = vld [vmem:[%s295] sm:$0xff]
          %s297 = scalar_lea.vmem %s208, 80 [#allocation5]
          %v298 = vld [vmem:[%s297] sm:$0xff]
          %s299 = scalar_lea.vmem %s208, 88 [#allocation5]
          %v300 = vld [vmem:[%s299] sm:$0xff]
          %s301 = sld [smem:[#allocation4 + %s269]]
          %v302 = vstv %s301
          %v303 = vmul.f32 %v302, %v278
          %s304 = sld [smem:[#allocation4 + %s271]]
          %v305 = vstv %s304
          %v306 = vmul.f32 %v305, %v280
          %s307 = sld [smem:[#allocation4 + %s273]]
          %v308 = vstv %s307
          %v309 = vmul.f32 %v308, %v282
          %s310 = sld [smem:[#allocation4 + %s275]]
          %v311 = vstv %s310
          %v312 = vmul.f32 %v311, %v284
          %s313 = sadd.s32 %s269, 4
          %s314 = sld [smem:[#allocation4 + %s313]]
          %v315 = vstv %s314
          %v316 = vmul.f32 %v315, %v286
          %s317 = sadd.s32 %s269, 5
          %s318 = sld [smem:[#allocation4 + %s317]]
          %v319 = vstv %s318
          %v320 = vmul.f32 %v319, %v288
          %s321 = sadd.s32 %s269, 6
          %s322 = sld [smem:[#allocation4 + %s321]]
          %v323 = vstv %s322
          %v324 = vmul.f32 %v323, %v290
          %s325 = sadd.s32 %s269, 7
          %s326 = sld [smem:[#allocation4 + %s325]]
          %v327 = vstv %s326
          %v328 = vmul.f32 %v327, %v292
          %s329 = sadd.s32 %s269, 8
          %s330 = sld [smem:[#allocation4 + %s329]]
          %v331 = vstv %s330
          %v332 = vmul.f32 %v331, %v294
          %s333 = sadd.s32 %s269, 9
          %s334 = sld [smem:[#allocation4 + %s333]]
          %v335 = vstv %s334
          %v336 = vmul.f32 %v335, %v296
          %s337 = sadd.s32 %s269, 10
          %s338 = sld [smem:[#allocation4 + %s337]]
          %v339 = vstv %s338
          %v340 = vmul.f32 %v339, %v298
          %s341 = sadd.s32 %s269, 11
          %s342 = sld [smem:[#allocation4 + %s341]]
          %v343 = vstv %s342
          %v344 = vmul.f32 %v343, %v300
          %v345 = vadd.f32 %v303, %v306
          %v346 = vadd.f32 %v309, %v312
          %v347 = vadd.f32 %v316, %v320
          %v348 = vadd.f32 %v324, %v328
          %v349 = vadd.f32 %v332, %v336
          %v350 = vadd.f32 %v340, %v344
          %v351 = vadd.f32 %v345, %v346
          %v352 = vadd.f32 %v347, %v348
          %v353 = vadd.f32 %v349, %v350
          %v354 = vadd.f32 %v351, %v352
          %v355 = vadd.f32 %v354, %v353
          %s356 = smul.u32 %s270, 8
          %s357 = scalar_lea.vmem %s208, %s356 [#allocation5]
          %v358 = vld [vmem:[%s357] sm:$0xff]
          %s359 = smul.u32 %s272, 8
          %s360 = scalar_lea.vmem %s208, %s359 [#allocation5]
          %v361 = vld [vmem:[%s360] sm:$0xff]
          %s362 = scalar_select %p277, 1, 0
          %v363 = vstv %s362
          %vm364 = vcmp.eq.s32.totalorder %v363, 1
          %v365 = vsel %vm364, %v361, -1e+30
          %v366 = vmax.f32 %v355, %v358
          %v367 = vmax.f32 %v366, %v365
          %v368 = vsub.f32 %v355, %v367
          %v369 = vmul.f32 %v368, 1.442695
          %v370 = vpow.pop %v369
          %v371 = vsub.f32 %v358, %v367
          %v372 = vmul.f32 %v371, 1.442695
          %v373 = vpow.pop %v372
          %v374 = vadd.f32 %v370, %v373
          %v375 = vsub.f32 %v365, %v367
          %v376 = vmul.f32 %v375, 1.442695
          %v377 = vpow.pop %v376
          %v378 = vadd.f32 %v374, %v377
          %v379 = vlog2.pop %v378
          %v380 = vmul.f32 %v379, 0.6931472
          %v381 = vadd.f32 %v367, %v380
          %v382 = vld [vmem:[%s251] sm:$0x3]
          %v383 = vunpack.c.0.s8 %v382
          %vm384 = vcmp.gt.s32.totalorder %v383, 0
          %v385 = vstv %s274
          %v386 = vadd.s32 %v383, %v385
          %v387 = vsel %vm384, %v386, %v383
          %vm388 = vcmp.eq.s32.totalorder %v387, 1
          %vm389 = vcmp.eq.s32.totalorder %v387, 2
          %v390 = vsel %vm389, %v361, %v355
          %v391 = vsel %vm388, %v358, %v390
          %vm392 = vcmp.ge.s32.totalorder %v387, 0
          %v393 = vstv %s276
          %vm394 = vcmp.le.s32.totalorder %v387, %v393
          %vm395 = vmand %vm392, %vm394
          %v396 = vsel %vm395, 1, 0
          %v397 = vcvt.s32.f32 %v396
          %v398 = vsub.f32 %v381, %v391
          %v399 = vlaneseq
          %v400 = vshrl.u32 %v399, 7
          %v401 = vstv %s264
          %vm402 = vcmp.lt.s32.totalorder %v400, %v401
          %v403 = vld [vmem:[%s238] sm:$0xff]
          %v404 = vmul.f32 %v397, %v398
          %v405 = vsel %vm402, %v404, 0.0
          %v406 = vadd.f32 %v403, %v405
          %407 = vst [vmem:[%s238] sm:$0xff] %v406
          %s408 = scalar_lea.vmem %s238, 8 [#allocation8]
          %v409 = vld [vmem:[%s408] sm:$0xff]
          %v410 = vsel %vm402, %v397, 0.0
          %v411 = vadd.f32 %v409, %v410
          %412 = vst [vmem:[%s408] sm:$0xff] %v411
        $region40: #{tpu_custom_call.1} parent=27 // pred_fallthru
          _
        %s413 = sand.u32 %s124, 1
        %s414 = scalar_lea.sflag [#allocation7], %s413
        %s415 = sand.u32 %s124, 1
        %s416 = smul.addr %s415, 16
        %s417 = scalar_lea.vmem [#allocation8], %s416
        // Predicated region
        $region41: #{tpu_custom_call.1} parent=27 // pred_check
          %p418 = pneg %p134
        $region42: #{tpu_custom_call.1} parent=27 // pred_check_branch
          %420 = sbr.rel (%p418) target = $region44
        $region43: #{tpu_custom_call.1} parent=27 // pred_region
          %s421 = sadd.s32 %s32, %s33
          %s423 = ssub.s32 256, 256
          %424 = vsyncadd %s414, %s423
          %s425 = smul.addr %s421, 2
          %s426 = smul.addr %s425, 128
          %s427 = scalar_lea.hbm %s4, %s426
          %s428 = sshll.u32 %s417, 4
          %s429 = int_to_ptr.vmem [resolvable:$true] %s428
          %434 = dma.vmem_to_hbm [thread:$0]  %s429, 256, %s427, %s414, 128, 128, 8
        $region44: #{tpu_custom_call.1} parent=27 // pred_fallthru
          _
      $region28: #{tpu_custom_call.1} parent=5 // pred_fallthru
        _
      %p435 = scmp.le.s32.totalorder 2, %s22
      // Predicated region
      $region45: #{tpu_custom_call.1} parent=5 // pred_check
        %p436 = pneg %p435
      $region46: #{tpu_custom_call.1} parent=5 // pred_check_branch
        %438 = sbr.rel (%p436) target = $region48
      $region47: #{tpu_custom_call.1} parent=5 // pred_region
        %s439 = ssub.s32 %s22, 2
        // Predicated region
        $region49: #{tpu_custom_call.1} parent=47 // pred_check
          %p440 = pneg %p140
        $region50: #{tpu_custom_call.1} parent=47 // pred_check_branch
          %442 = sbr.rel (%p440) target = $region52
        $region51: #{tpu_custom_call.1} parent=47 // pred_region
          %s443 = sand.u32 %s125, 1
          %s444 = scalar_lea.sflag [#allocation7], %s443
          %s445 = sand.u32 %s125, 1
          %s446 = smul.addr %s445, 16
          %s447 = scalar_lea.vmem [#allocation8], %s446
          %448 = dma.done %s444, 256
        $region52: #{tpu_custom_call.1} parent=47 // pred_fallthru
          _
      $region48: #{tpu_custom_call.1} parent=5 // pred_fallthru
        _
    $region6: #{tpu_custom_call.1} parent=1 // loop_footer
      %s26 = sadd.s32 1, %s22
    $region7: #{tpu_custom_call.1} parent=1 // loop_footer_branch
      %21 = sbr.rel target = $region3
    $region8: #{tpu_custom_call.1} parent=1 // loop_exit
      _
    %449 = vsyncpa [#allocation6], 1
    %s450 = scalar_lea.sflag [#allocation6], 1
    %451 = vsyncpa %s450, 1
    %452 = vsyncpa [#allocation7], 1
    %s453 = scalar_lea.sflag [#allocation7], 1
    %454 = vsyncpa %s453, 1

</llo_original>
